<compile_context>
chip_gen: v5e
topology: v5e:2x2
jax: 0.10.0
libtpu: 0.0.40
codegen_flags: <defaults>
</compile_context>

<pallas_src>
import functools

import jax
import jax.numpy as jnp
from jax import lax
from jax.experimental import pallas as pl
from jax.experimental.pallas import tpu as pltpu


def _elu(x):
    # ELU with alpha = 1.0 (default nn.ELU()).  exp(min(x,0))-1 instead of
    # expm1 (expm1 is not guaranteed to lower in Mosaic); the ulp-level
    # difference near 0 is far below the test tolerance.
    return jnp.where(x > 0, x, jnp.exp(jnp.minimum(x, 0.0)) - 1.0)


# ---------------------------------------------------------------------------
# Kernel
# ---------------------------------------------------------------------------
def _tcn_block_kernel(x_ref, w1_ref, w2_ref, b1_ref, b2_ref, o_ref, *,
                      kernel_size, dilation, seq_len):
    K = kernel_size

    # Single wide lane-dense load: (C, W) with W = block_b * seq_len.
    x_bf = x_ref[...]
    x_f32 = x_bf.astype(jnp.float32)          # f32 copy only for the residual

    # Hoisted per-lane "time within sequence" masks, shared by conv1 and conv2.
    t_in_seq = lax.broadcasted_iota(jnp.int32, x_bf.shape, 1) % seq_len
    zero = jnp.zeros_like(x_bf)
    keep = {}
    for k in range(K - 1):
        shift = (K - 1 - k) * dilation
        keep[shift] = t_in_seq >= shift       # bool, built once, reused

    def causal_conv(h_bf, w_ref):
        # Stacked shifted input (K*C, W): row block k holds h[:, t - (K-1-k)*d]
        # (zero for t < shift within each sequence; the same mask also kills
        # cross-sequence and wrap-around bleed from the roll).  Then one bf16
        # MXU matmul with f32 accumulation.
        parts = []
        for k in range(K):
            shift = (K - 1 - k) * dilation
            if shift == 0:
                parts.append(h_bf)
            else:
                rolled = jnp.roll(h_bf, shift, axis=1)
                parts.append(jnp.where(keep[shift], rolled, zero))
        stacked = jnp.concatenate(parts, axis=0)
        return jnp.dot(w_ref[...], stacked, preferred_element_type=jnp.float32)

    # conv1 (+bias, BN scale folded into w1) -> ELU -> drop1 (identity in eval)
    h = _elu(causal_conv(x_bf, w1_ref) + b1_ref[...])
    # TODO(synk): training-mode dropout (scaled Bernoulli mask) not implemented;
    # eval-mode dropout is the identity, which is what is computed here.

    # conv2 -> bn2 -> ELU -> drop2 (identity)
    h = _elu(causal_conv(h.astype(x_bf.dtype), w2_ref) + b2_ref[...])

    # reshaping_conv == nn.Identity() (in_channels == n_filters) -> residual -> ELU
    o_ref[...] = _elu(x_f32 + h).astype(o_ref.dtype)   # single wide lane-dense store


# ---------------------------------------------------------------------------
# Block / VMEM sizing helpers
# ---------------------------------------------------------------------------
def _vmem_capacity_bytes():
    try:
        return int(pltpu.get_tpu_info().vmem_capacity_bytes)
    except Exception:
        return 64 * 1024 * 1024   # conservative: v7x per-TensorCore VMEM


def _block_vmem_bytes(block_b, C, F, K, T):
    """Rough per-grid-step VMEM estimate: double-buffered I/O blocks plus the
    largest in-kernel intermediates (stacked taps, f32 temps, masks)."""
    W = block_b * T
    io = 2 * (2 * C * W + 2 * F * W)                     # bf16 in + out, x2 buffers
    weights = 2 * 2 * (F * K * C + F * K * F) + 2 * 4 * F
    interm = W * (2 * K * max(C, F)                      # stacked taps (bf16)
                  + 4 * C + 4 * C                        # f32 residual copy + iota
                  + 2 * (K - 1) * C                      # hoisted masks
                  + 3 * 4 * F)                           # f32 conv/activation temps
    return io + weights + interm


def _pick_block_b(B, C, F, K, T, budget):
    """Largest batch sub-block with (a) >= 2 grid steps per TensorCore
    (grid >= 4 when B allows -> pipelining on both v7x cores) and (b) the
    per-step VMEM footprint within `budget`."""
    min_steps = min(B, 4)
    best = 1
    for d in range(1, B + 1):
        if B % d:
            continue
        if B // d < min_steps:
            continue
        if _block_vmem_bytes(d, C, F, K, T) > budget:
            continue
        best = d
    return best


# ---------------------------------------------------------------------------
# Wrapper
# ---------------------------------------------------------------------------
def tcn_residual_block(x, w1, w2, bn1, bn2, *, conv1_bias=None, conv2_bias=None,
                       dilation=1, eps=1e-5, block_b=None,
                       io_dtype=jnp.bfloat16):
    """x: (B, C, T); w1: (F, C, K); w2: (F, F, K); bn*: (gamma, beta, mean, var);
    conv*_bias: optional (F,) conv biases (nn.Conv1d default bias=True).

    Requires C == F (otherwise the reference module's reshaping_conv branch,
    which is ill-formed in the PyTorch source, would be needed).
    """
    B, C, T = x.shape
    Fn, Cin, K = w1.shape
    assert Cin == C and C == Fn, "residual path requires in_channels == n_filters"
    # TODO(synk): in_channels != n_filters branch not covered (the PyTorch
    # source's nn.Conv1d(n_filters, kernel_size=1, ...) call is ill-formed).
    assert (K - 1) * dilation < T, "causal receptive field must fit in T"
    orig_dtype = x.dtype

    def fold(w, conv_bias, bn):
        # Fold BN scale into the conv weight (per output channel); fold the
        # conv bias and BN shift into a single per-channel bias.
        gamma, beta, mean, var = (p.astype(jnp.float32) for p in bn)
        inv = gamma / jnp.sqrt(var + eps)                        # (F,)
        w_scaled = w.astype(jnp.float32) * inv[:, None, None]    # (F, Cin, K)
        cb = jnp.zeros_like(mean) if conv_bias is None else conv_bias.astype(jnp.float32)
        bias = (beta + (cb - mean) * inv).reshape(-1, 1)         # (F, 1) f32
        # (F, Cin, K) -> (F, K, Cin) -> (F, K*Cin): column k*Cin + c matches the
        # row order of the stacked shifted input in the kernel.
        fout, cin, kk = w.shape
        w_packed = jnp.transpose(w_scaled, (0, 2, 1)).reshape(fout, kk * cin)
        return w_packed.astype(jnp.bfloat16), bias

    w1p, b1 = fold(w1, conv1_bias, bn1)
    w2p, b2 = fold(w2, conv2_bias, bn2)

    # Lane-align each sequence: pad T up to a multiple of 128 with zeros.
    # Causal convs only look backwards, so padded tail positions never affect
    # real outputs; they are sliced off after the kernel.
    T_pad = ((T + 127) // 128) * 128
    if T_pad != T:
        x = jnp.pad(x, ((0, 0), (0, 0), (0, T_pad - T)))

    vmem_cap = _vmem_capacity_bytes()
    if block_b is None:
        block_b = _pick_block_b(B, C, Fn, K, T_pad, budget=(vmem_cap * 3) // 4)
    assert B % block_b == 0
    W = block_b * T_pad
    est = _block_vmem_bytes(block_b, C, Fn, K, T_pad)
    vmem_limit = int(min(vmem_cap, max(32 * 1024 * 1024, 2 * est)))

    # Lane-dense activation slab: (B, C, T) -> (C, B*T), bf16 at the kernel
    # boundary (halves HBM traffic; kernel is memory/overhead bound at C=F=16).
    xl = jnp.transpose(x, (1, 0, 2)).reshape(C, B * T_pad).astype(io_dtype)

    kernel = functools.partial(_tcn_block_kernel, kernel_size=K,
                               dilation=dilation, seq_len=T_pad)

    # TODO(synk): for large T, add a time-axis grid dimension with a
    # (K-1)*dilation causal halo (overlapping index_map or VMEM carry) instead
    # of loading full sequences per step.
    out = pl.pallas_call(
        kernel,
        out_shape=jax.ShapeDtypeStruct((C, B * T_pad), io_dtype),
        grid=(B // block_b,),
        in_specs=[
            pl.BlockSpec((C, W), lambda i: (0, i)),        # x slab block
            pl.BlockSpec((Fn, K * C), lambda i: (0, 0)),   # w1 (BN-folded, bf16)
            pl.BlockSpec((Fn, K * Fn), lambda i: (0, 0)),  # w2 (BN-folded, bf16)
            pl.BlockSpec((Fn, 1), lambda i: (0, 0)),       # folded bias 1
            pl.BlockSpec((Fn, 1), lambda i: (0, 0)),       # folded bias 2
        ],
        out_specs=pl.BlockSpec((C, W), lambda i: (0, i)),
        compiler_params=pltpu.CompilerParams(
            dimension_semantics=("parallel",),
            vmem_limit_bytes=vmem_limit),
    )(xl, w1p, w2p, b1, b2)

    out = out.reshape(C, B, T_pad).transpose(1, 0, 2)[:, :, :T]
    return out.astype(orig_dtype)


# ---------------------------------------------------------------------------
# Pure-JAX reference (independent implementation, for correctness check).
# ---------------------------------------------------------------------------
def _ref_causal_conv(x, w, b, dilation):
    pad = (w.shape[-1] - 1) * dilation
    y = lax.conv_general_dilated(
        x, w, window_strides=(1,), padding=[(pad, 0)],
        rhs_dilation=(dilation,),
        dimension_numbers=("NCH", "OIH", "NCH"))
    return y + b[None, :, None]


def _ref_forward(x, w1, w2, bn1, bn2, cb1, cb2, dilation=1, eps=1e-5):
    def bn(h, params):
        gamma, beta, mean, var = params
        return (h - mean[None, :, None]) / jnp.sqrt(var[None, :, None] + eps) \
            * gamma[None, :, None] + beta[None, :, None]

    h = _ref_causal_conv(x, w1, cb1, dilation)
    h = jax.nn.elu(bn(h, bn1))
    h = _ref_causal_conv(h, w2, cb2, dilation)
    h = jax.nn.elu(bn(h, bn2))
    return jax.nn.elu(x + h)


if __name__ == "__main__":
    # in_channels == n_filters == 16 (reshaping_conv is Identity),
    # kernel_size=4, dilation=2, batch=4 (-> block_b=1, 4 parallel grid steps),
    # sequence length 128.
    B, C, T, K, DIL = 4, 16, 128, 4, 2
    Fn = C  # n_filters

    key = jax.random.PRNGKey(0)
    keys = jax.random.split(key, 13)

    # kaiming_uniform_ for conv weights: bound = sqrt(6 / fan_in), fan_in = Cin*K
    bd1 = (6.0 / (C * K)) ** 0.5
    w1 = jax.random.uniform(keys[0], (Fn, C, K), jnp.float32, -bd1, bd1)
    bd2 = (6.0 / (Fn * K)) ** 0.5
    w2 = jax.random.uniform(keys[1], (Fn, Fn, K), jnp.float32, -bd2, bd2)

    # Conv1d biases (nn.Conv1d default bias=True).
    cb1 = 0.05 * jax.random.normal(keys[11], (Fn,), jnp.float32)
    cb2 = 0.05 * jax.random.normal(keys[12], (Fn,), jnp.float32)

    # BatchNorm1d parameters / running stats (inference mode), nontrivial values.
    bn1 = (1.0 + 0.1 * jax.random.normal(keys[2], (Fn,), jnp.float32),
           0.1 * jax.random.normal(keys[3], (Fn,), jnp.float32),
           0.1 * jax.random.normal(keys[4], (Fn,), jnp.float32),
           jax.random.uniform(keys[5], (Fn,), jnp.float32, 0.5, 1.5))
    bn2 = (1.0 + 0.1 * jax.random.normal(keys[6], (Fn,), jnp.float32),
           0.1 * jax.random.normal(keys[7], (Fn,), jnp.float32),
           0.1 * jax.random.normal(keys[8], (Fn,), jnp.float32),
           jax.random.uniform(keys[9], (Fn,), jnp.float32, 0.5, 1.5))

    x = jax.random.normal(keys[10], (B, C, T), jnp.float32)

    out = tcn_residual_block(x, w1, w2, bn1, bn2,
                             conv1_bias=cb1, conv2_bias=cb2, dilation=DIL)
    out = jax.block_until_ready(out)

    ref = _ref_forward(x, w1, w2, bn1, bn2, cb1, cb2, dilation=DIL)
    assert out.shape == (B, C, T)
    # bf16 activation I/O + bf16 MXU operands (f32 accumulation) vs f32
    # reference -> loosened tolerance; real bugs (wrong shift/mask/fold) would
    # produce O(1) errors, well above this.
    assert jnp.allclose(out, ref, atol=1e-1, rtol=1e-1), \
        f"max err {jnp.max(jnp.abs(out - ref))}"

    print("KERNEL_OK")
</pallas_src>

<mosaic_0001>
module attributes {stable_mosaic.version = 11 : i64} {
  func.func @_tcn_block_kernel(%arg0: i32, %arg1: memref<16x128xbf16, #tpu.memory_space<vmem>>, %arg2: memref<16x64xbf16, #tpu.memory_space<vmem>>, %arg3: memref<16x64xbf16, #tpu.memory_space<vmem>>, %arg4: memref<16x1xf32, #tpu.memory_space<vmem>>, %arg5: memref<16x1xf32, #tpu.memory_space<vmem>>, %arg6: memref<16x128xbf16, #tpu.memory_space<vmem>>) attributes {dimension_semantics = [#tpu.dimension_semantics<parallel>], iteration_bounds = array<i64: 4>, scalar_prefetch = 0 : i64, scratch_operands = 0 : i64, tpu.core_type = #tpu.core_type<tc>, window_params = [{transform_indices = @transform_0, window_bounds = array<i64: 16, 128>}, {pipeline_mode = #tpu.pipeline_mode<synchronous>, transform_indices = @transform_1, window_bounds = array<i64: 16, 64>}, {pipeline_mode = #tpu.pipeline_mode<synchronous>, transform_indices = @transform_2, window_bounds = array<i64: 16, 64>}, {pipeline_mode = #tpu.pipeline_mode<synchronous>, transform_indices = @transform_3, window_bounds = array<i64: 16, 1>}, {pipeline_mode = #tpu.pipeline_mode<synchronous>, transform_indices = @transform_4, window_bounds = array<i64: 16, 1>}, {transform_indices = @transform_5, window_bounds = array<i64: 16, 128>}]} {
    %c0 = arith.constant 0 : index
    %c0_0 = arith.constant 0 : index
    %0 = vector.load %arg1[%c0, %c0_0] : memref<16x128xbf16, #tpu.memory_space<vmem>>, vector<16x128xbf16>
    %1 = arith.extf %0 : vector<16x128xbf16> to vector<16x128xf32>
    %2 = tpu.iota {dimensions = array<i32: 1>} : vector<16x128xi32>
    %c128_i32 = arith.constant 128 : i32
    %c0_i32 = arith.constant 0 : i32
    %3 = arith.cmpi eq, %c128_i32, %c0_i32 : i32
    %c1_i32 = arith.constant 1 : i32
    %4 = arith.select %3, %c1_i32, %c128_i32 : i32
    %5 = vector.broadcast %4 : i32 to vector<16x128xi32>
    %6 = arith.remsi %2, %5 : vector<16x128xi32>
    %c0_i32_1 = arith.constant 0 : i32
    %7 = vector.broadcast %c0_i32_1 : i32 to vector<16x128xi32>
    %8 = arith.cmpi ne, %6, %7 : vector<16x128xi32>
    %c0_i32_2 = arith.constant 0 : i32
    %9 = vector.broadcast %c0_i32_2 : i32 to vector<16x128xi32>
    %10 = arith.cmpi slt, %6, %9 : vector<16x128xi32>
    %c0_i32_3 = arith.constant 0 : i32
    %11 = arith.cmpi slt, %4, %c0_i32_3 : i32
    %12 = vector.broadcast %11 : i1 to vector<16x128xi1>
    %13 = vector.broadcast %12 : vector<16x128xi1> to vector<16x128xi1>
    %14 = arith.xori %10, %13 : vector<16x128xi1>
    %15 = arith.andi %14, %8 : vector<16x128xi1>
    %16 = vector.broadcast %4 : i32 to vector<16x128xi32>
    %17 = arith.addi %6, %16 : vector<16x128xi32>
    %18 = arith.select %15, %17, %6 : vector<16x128xi1>, vector<16x128xi32>
    %cst = arith.constant 0.000000e+00 : bf16
    %19 = vector.broadcast %cst : bf16 to vector<16x128xbf16>
    %c6_i32 = arith.constant 6 : i32
    %20 = vector.broadcast %c6_i32 : i32 to vector<16x128xi32>
    %21 = arith.cmpi sge, %18, %20 : vector<16x128xi32>
    %c4_i32 = arith.constant 4 : i32
    %22 = vector.broadcast %c4_i32 : i32 to vector<16x128xi32>
    %23 = arith.cmpi sge, %18, %22 : vector<16x128xi32>
    %c2_i32 = arith.constant 2 : i32
    %24 = vector.broadcast %c2_i32 : i32 to vector<16x128xi32>
    %25 = arith.cmpi sge, %18, %24 : vector<16x128xi32>
    %26 = vector.extract_strided_slice %0 {offsets = [0, 122], sizes = [16, 6], strides = [1, 1]} : vector<16x128xbf16> to vector<16x6xbf16>
    %27 = vector.extract_strided_slice %0 {offsets = [0, 0], sizes = [16, 122], strides = [1, 1]} : vector<16x128xbf16> to vector<16x122xbf16>
    %28 = tpu.concatenate %26, %27 in 1 : vector<16x6xbf16>, vector<16x122xbf16> -> vector<16x128xbf16>
    %29 = arith.select %21, %28, %19 : vector<16x128xi1>, vector<16x128xbf16>
    %30 = vector.extract_strided_slice %0 {offsets = [0, 124], sizes = [16, 4], strides = [1, 1]} : vector<16x128xbf16> to vector<16x4xbf16>
    %31 = vector.extract_strided_slice %0 {offsets = [0, 0], sizes = [16, 124], strides = [1, 1]} : vector<16x128xbf16> to vector<16x124xbf16>
    %32 = tpu.concatenate %30, %31 in 1 : vector<16x4xbf16>, vector<16x124xbf16> -> vector<16x128xbf16>
    %33 = arith.select %23, %32, %19 : vector<16x128xi1>, vector<16x128xbf16>
    %34 = vector.extract_strided_slice %0 {offsets = [0, 126], sizes = [16, 2], strides = [1, 1]} : vector<16x128xbf16> to vector<16x2xbf16>
    %35 = vector.extract_strided_slice %0 {offsets = [0, 0], sizes = [16, 126], strides = [1, 1]} : vector<16x128xbf16> to vector<16x126xbf16>
    %36 = tpu.concatenate %34, %35 in 1 : vector<16x2xbf16>, vector<16x126xbf16> -> vector<16x128xbf16>
    %37 = arith.select %25, %36, %19 : vector<16x128xi1>, vector<16x128xbf16>
    %38 = tpu.concatenate %29, %33, %37, %0 in 0 : vector<16x128xbf16>, vector<16x128xbf16>, vector<16x128xbf16>, vector<16x128xbf16> -> vector<64x128xbf16>
    %c0_4 = arith.constant 0 : index
    %c0_5 = arith.constant 0 : index
    %39 = vector.load %arg2[%c0_4, %c0_5] : memref<16x64xbf16, #tpu.memory_space<vmem>>, vector<16x64xbf16>
    %cst_6 = arith.constant dense<0.000000e+00> : vector<16x128xf32>
    %40 = tpu.matmul %39, %38, %cst_6 {dimension_numbers = #tpu.dot_dimension_numbers<[1], [0], [0], [1], [0, 0, 1, 1], [], []>} : vector<16x64xbf16>, vector<64x128xbf16>, vector<16x128xf32> -> vector<16x128xf32>
    %c0_7 = arith.constant 0 : index
    %c0_8 = arith.constant 0 : index
    %41 = vector.load %arg4[%c0_7, %c0_8] : memref<16x1xf32, #tpu.memory_space<vmem>>, vector<16x1xf32>
    %42 = vector.broadcast %41 : vector<16x1xf32> to vector<16x128xf32>
    %43 = arith.addf %40, %42 : vector<16x128xf32>
    %cst_9 = arith.constant 0.000000e+00 : f32
    %44 = vector.broadcast %cst_9 : f32 to vector<16x128xf32>
    %45 = arith.cmpf ogt, %43, %44 : vector<16x128xf32>
    %cst_10 = arith.constant 0.000000e+00 : f32
    %46 = vector.broadcast %cst_10 : f32 to vector<16x128xf32>
    %47 = arith.minimumf %43, %46 : vector<16x128xf32>
    %48 = math.exp %47 : vector<16x128xf32>
    %cst_11 = arith.constant 1.000000e+00 : f32
    %49 = vector.broadcast %cst_11 : f32 to vector<16x128xf32>
    %50 = arith.subf %48, %49 : vector<16x128xf32>
    %51 = arith.select %45, %43, %50 : vector<16x128xi1>, vector<16x128xf32>
    %52 = arith.truncf %51 : vector<16x128xf32> to vector<16x128xbf16>
    %53 = vector.extract_strided_slice %52 {offsets = [0, 122], sizes = [16, 6], strides = [1, 1]} : vector<16x128xbf16> to vector<16x6xbf16>
    %54 = vector.extract_strided_slice %52 {offsets = [0, 0], sizes = [16, 122], strides = [1, 1]} : vector<16x128xbf16> to vector<16x122xbf16>
    %55 = tpu.concatenate %53, %54 in 1 : vector<16x6xbf16>, vector<16x122xbf16> -> vector<16x128xbf16>
    %56 = arith.select %21, %55, %19 : vector<16x128xi1>, vector<16x128xbf16>
    %57 = vector.extract_strided_slice %52 {offsets = [0, 124], sizes = [16, 4], strides = [1, 1]} : vector<16x128xbf16> to vector<16x4xbf16>
    %58 = vector.extract_strided_slice %52 {offsets = [0, 0], sizes = [16, 124], strides = [1, 1]} : vector<16x128xbf16> to vector<16x124xbf16>
    %59 = tpu.concatenate %57, %58 in 1 : vector<16x4xbf16>, vector<16x124xbf16> -> vector<16x128xbf16>
    %60 = arith.select %23, %59, %19 : vector<16x128xi1>, vector<16x128xbf16>
    %61 = vector.extract_strided_slice %52 {offsets = [0, 126], sizes = [16, 2], strides = [1, 1]} : vector<16x128xbf16> to vector<16x2xbf16>
    %62 = vector.extract_strided_slice %52 {offsets = [0, 0], sizes = [16, 126], strides = [1, 1]} : vector<16x128xbf16> to vector<16x126xbf16>
    %63 = tpu.concatenate %61, %62 in 1 : vector<16x2xbf16>, vector<16x126xbf16> -> vector<16x128xbf16>
    %64 = arith.select %25, %63, %19 : vector<16x128xi1>, vector<16x128xbf16>
    %65 = tpu.concatenate %56, %60, %64, %52 in 0 : vector<16x128xbf16>, vector<16x128xbf16>, vector<16x128xbf16>, vector<16x128xbf16> -> vector<64x128xbf16>
    %c0_12 = arith.constant 0 : index
    %c0_13 = arith.constant 0 : index
    %66 = vector.load %arg3[%c0_12, %c0_13] : memref<16x64xbf16, #tpu.memory_space<vmem>>, vector<16x64xbf16>
    %cst_14 = arith.constant dense<0.000000e+00> : vector<16x128xf32>
    %67 = tpu.matmul %66, %65, %cst_14 {dimension_numbers = #tpu.dot_dimension_numbers<[1], [0], [0], [1], [0, 0, 1, 1], [], []>} : vector<16x64xbf16>, vector<64x128xbf16>, vector<16x128xf32> -> vector<16x128xf32>
    %c0_15 = arith.constant 0 : index
    %c0_16 = arith.constant 0 : index
    %68 = vector.load %arg5[%c0_15, %c0_16] : memref<16x1xf32, #tpu.memory_space<vmem>>, vector<16x1xf32>
    %69 = vector.broadcast %68 : vector<16x1xf32> to vector<16x128xf32>
    %70 = arith.addf %67, %69 : vector<16x128xf32>
    %cst_17 = arith.constant 0.000000e+00 : f32
    %71 = vector.broadcast %cst_17 : f32 to vector<16x128xf32>
    %72 = arith.cmpf ogt, %70, %71 : vector<16x128xf32>
    %cst_18 = arith.constant 0.000000e+00 : f32
    %73 = vector.broadcast %cst_18 : f32 to vector<16x128xf32>
    %74 = arith.minimumf %70, %73 : vector<16x128xf32>
    %75 = math.exp %74 : vector<16x128xf32>
    %cst_19 = arith.constant 1.000000e+00 : f32
    %76 = vector.broadcast %cst_19 : f32 to vector<16x128xf32>
    %77 = arith.subf %75, %76 : vector<16x128xf32>
    %78 = arith.select %72, %70, %77 : vector<16x128xi1>, vector<16x128xf32>
    %79 = arith.addf %1, %78 : vector<16x128xf32>
    %cst_20 = arith.constant 0.000000e+00 : f32
    %80 = vector.broadcast %cst_20 : f32 to vector<16x128xf32>
    %81 = arith.cmpf ogt, %79, %80 : vector<16x128xf32>
    %cst_21 = arith.constant 0.000000e+00 : f32
    %82 = vector.broadcast %cst_21 : f32 to vector<16x128xf32>
    %83 = arith.minimumf %79, %82 : vector<16x128xf32>
    %84 = math.exp %83 : vector<16x128xf32>
    %cst_22 = arith.constant 1.000000e+00 : f32
    %85 = vector.broadcast %cst_22 : f32 to vector<16x128xf32>
    %86 = arith.subf %84, %85 : vector<16x128xf32>
    %87 = arith.select %81, %79, %86 : vector<16x128xi1>, vector<16x128xf32>
    %88 = arith.truncf %87 : vector<16x128xf32> to vector<16x128xbf16>
    %c0_23 = arith.constant 0 : index
    %c0_24 = arith.constant 0 : index
    %89 = vector.load %arg6[%c0_23, %c0_24] : memref<16x128xbf16, #tpu.memory_space<vmem>>, vector<16x128xbf16>
    tpu.vector_store %arg6[%c0_23, %c0_24], %88 {strides = array<i32>} : memref<16x128xbf16, #tpu.memory_space<vmem>>, vector<16x128xbf16>,
    return
  }
  func.func @transform_0(%arg0: i32) -> (i32, i32) {
    %c0_i32 = arith.constant 0 : i32
    %c0_i32_0 = arith.constant 0 : i32
    return %c0_i32, %arg0 : i32, i32
  }
  func.func @transform_1(%arg0: i32) -> (i32, i32) {
    %c0_i32 = arith.constant 0 : i32
    %c0_i32_0 = arith.constant 0 : i32
    %c0_i32_1 = arith.constant 0 : i32
    return %c0_i32, %c0_i32_0 : i32, i32
  }
  func.func @transform_2(%arg0: i32) -> (i32, i32) {
    %c0_i32 = arith.constant 0 : i32
    %c0_i32_0 = arith.constant 0 : i32
    %c0_i32_1 = arith.constant 0 : i32
    return %c0_i32, %c0_i32_0 : i32, i32
  }
  func.func @transform_3(%arg0: i32) -> (i32, i32) {
    %c0_i32 = arith.constant 0 : i32
    %c0_i32_0 = arith.constant 0 : i32
    %c0_i32_1 = arith.constant 0 : i32
    return %c0_i32, %c0_i32_0 : i32, i32
  }
  func.func @transform_4(%arg0: i32) -> (i32, i32) {
    %c0_i32 = arith.constant 0 : i32
    %c0_i32_0 = arith.constant 0 : i32
    %c0_i32_1 = arith.constant 0 : i32
    return %c0_i32, %c0_i32_0 : i32, i32
  }
  func.func @transform_5(%arg0: i32) -> (i32, i32) {
    %c0_i32 = arith.constant 0 : i32
    %c0_i32_0 = arith.constant 0 : i32
    return %c0_i32, %arg0 : i32, i32
  }
}

</mosaic_0001>

<llo_original>
// kernel: tpu_custom_call.1
$region0: #{tpu_custom_call.1}
  #allocation0 [shape = 'u32[]', space=smem, size = 0x4, offset = 0x4, fixed_abs, tag = 'smem constant byte address 0x4 - core index']
  #allocation1 [shape = 'u32[72,128]{1,0:T(1,128)}', space=vmem, size = 0x9000, scoped, tag = 'internal scratch']
  %s0 = inlined_call_operand.vmem [shape: bf16[16,512], index: 0, kind: input, shape index: {}]
  %s1 = inlined_call_operand.hbm [shape: bf16[16,64], index: 1, kind: input, shape index: {}]
  %s2 = inlined_call_operand.hbm [shape: bf16[16,64], index: 2, kind: input, shape index: {}]
  %s3 = inlined_call_operand.vmem [shape: f32[16,1], index: 3, kind: input, shape index: {}]
  %s4 = inlined_call_operand.vmem [shape: f32[16,1], index: 4, kind: input, shape index: {}]
  %s5 = inlined_call_operand.hbm [shape: bf16[16,512], index: 5, kind: output, shape index: {}]
  %s6 = sld [smem:[#allocation0]]
  $region102: #{tpu_custom_call.1} parent=0
    _
  %s8 = ssub.s32 1, %s6
  %s9 = scalar_select 0, %s8, %s6
  $region1: #{tpu_custom_call.1} parent=0
    #allocation2 [shape = 'u8[8192]{0}', space=vmem, size = 0x2000, scoped, tag = 'input window, operand 0']
    #allocation3 [shape = 'u8[4096]{0}', space=vmem, size = 0x1000, scoped, tag = 'input window, operand 1, single buffered']
    #allocation4 [shape = 's32[2]{0}', space=sflag, size = 0x8, scoped, tag = 'scoped memory for tpu_custom_call.1']
    #allocation5 [shape = 's32[2]{0}', space=sflag, size = 0x8, scoped, tag = 'scoped memory for tpu_custom_call.1']
    #allocation6 [shape = 'u8[4096]{0}', space=vmem, size = 0x1000, scoped, tag = 'input window, operand 2, single buffered']
    #allocation7 [shape = 's32[1]{0}', space=sflag, size = 0x4, scoped, tag = 'scoped memory for tpu_custom_call.1']
    #allocation8 [shape = 'u8[8192]{0}', space=vmem, size = 0x2000, scoped, tag = 'output window, operand 0']
    %10 = vsyncpa [#allocation4], 0
    %11 = vsyncpa [#allocation7], 0
    %12 = vsyncpa [#allocation5], 0
    %s13 = scalar_lea.sflag [#allocation5], 1
    %14 = vsyncpa %s13, 0
    loop: start=0, step=1, limit=6
    $region2: #{tpu_custom_call.1} parent=1 // loop_pre_header
      _
    $region3: #{tpu_custom_call.1} parent=1 // loop_header
      %s16 = sphi 0, %s20
      %p17 = scmp.ge.s32.totalorder %s16, 6
      %s26 = sphi 0, %s28
      %s29 = sphi 0, %s26
      %s30 = sphi 0, %s29
      %s46 = sphi 0, %s30
      %s50 = sphi 0, %s50
      %s52 = sphi 0, %s50
      %s53 = sphi 0, %s52
      %s67 = sphi 0, %s53
      %s71 = sphi 0, %s71
      %s73 = sphi 0, %s71
      %s74 = sphi 0, %s73
      %s88 = sphi 0, %s74
      %s92 = sphi 0, %s92
      %s94 = sphi 0, %s92
      %s95 = sphi 0, %s94
      %s109 = sphi 0, %s95
      %s113 = sphi 0, %s113
      %s115 = sphi 0, %s113
      %s116 = sphi 0, %s115
      %s130 = sphi 0, %s116
      %s136 = sphi 0, %s138
      %s139 = sphi 0, %s136
      %s140 = sphi 0, %s139
      %s156 = sphi 0, %s140
    $region4: #{tpu_custom_call.1} parent=1 // loop_header_branch
      %19 = sbr.rel (%p17) target = $region8
    $region5: #{tpu_custom_call.1} parent=1 // loop_body
      %s21 = ssub.s32 %s16, 1
      %s22 = ssub.s32 %s16, 2
      %s23 = sadd.s32 %s16, 1
      %s24 = ssub.s32 %s16, %s23
      %p25 = scmp.eq.s32.totalorder %s24, 0
      %s27 = sadd.s32 %s26, 1
      %s28 = scalar_select %p25, %s26, %s27
      %p31 = pneg %p25
      %p32 = scmp.eq.s32.totalorder %s16, 3
      %p33 = por %p31, %p32
      %p34 = scmp.ne.s32.totalorder %s26, %s29
      %p35 = scmp.eq.s32.totalorder %s16, 0
      %p36 = por %p34, %p35
      %p37 = scmp.ne.s32.totalorder %s26, %s29
      %p38 = scmp.eq.s32.totalorder %s21, 3
      %p39 = por %p37, %p38
      %p40 = scmp.ne.s32.totalorder %s29, %s30
      %p41 = scmp.eq.s32.totalorder %s21, 0
      %p42 = por %p40, %p41
      %p43 = scmp.ne.s32.totalorder %s29, %s30
      %p44 = scmp.eq.s32.totalorder %s22, 3
      %p45 = por %p43, %p44
      %p47 = scmp.ne.s32.totalorder %s30, %s46
      %p48 = scmp.eq.s32.totalorder %s22, 0
      %p49 = por %p47, %p48
      %s51 = sadd.s32 %s50, 1
      %p54 = scmp.eq.s32.totalorder %s16, 3
      %p55 = scmp.ne.s32.totalorder %s50, %s52
      %p56 = scmp.eq.s32.totalorder %s16, 0
      %p57 = por %p55, %p56
      %p58 = scmp.ne.s32.totalorder %s50, %s52
      %p59 = scmp.eq.s32.totalorder %s21, 3
      %p60 = por %p58, %p59
      %p61 = scmp.ne.s32.totalorder %s52, %s53
      %p62 = scmp.eq.s32.totalorder %s21, 0
      %p63 = por %p61, %p62
      %p64 = scmp.ne.s32.totalorder %s52, %s53
      %p65 = scmp.eq.s32.totalorder %s22, 3
      %p66 = por %p64, %p65
      %p68 = scmp.ne.s32.totalorder %s53, %s67
      %p69 = scmp.eq.s32.totalorder %s22, 0
      %p70 = por %p68, %p69
      %s72 = sadd.s32 %s71, 1
      %p75 = scmp.eq.s32.totalorder %s16, 3
      %p76 = scmp.ne.s32.totalorder %s71, %s73
      %p77 = scmp.eq.s32.totalorder %s16, 0
      %p78 = por %p76, %p77
      %p79 = scmp.ne.s32.totalorder %s71, %s73
      %p80 = scmp.eq.s32.totalorder %s21, 3
      %p81 = por %p79, %p80
      %p82 = scmp.ne.s32.totalorder %s73, %s74
      %p83 = scmp.eq.s32.totalorder %s21, 0
      %p84 = por %p82, %p83
      %p85 = scmp.ne.s32.totalorder %s73, %s74
      %p86 = scmp.eq.s32.totalorder %s22, 3
      %p87 = por %p85, %p86
      %p89 = scmp.ne.s32.totalorder %s74, %s88
      %p90 = scmp.eq.s32.totalorder %s22, 0
      %p91 = por %p89, %p90
      %s93 = sadd.s32 %s92, 1
      %p96 = scmp.eq.s32.totalorder %s16, 3
      %p97 = scmp.ne.s32.totalorder %s92, %s94
      %p98 = scmp.eq.s32.totalorder %s16, 0
      %p99 = por %p97, %p98
      %p100 = scmp.ne.s32.totalorder %s92, %s94
      %p101 = scmp.eq.s32.totalorder %s21, 3
      %p102 = por %p100, %p101
      %p103 = scmp.ne.s32.totalorder %s94, %s95
      %p104 = scmp.eq.s32.totalorder %s21, 0
      %p105 = por %p103, %p104
      %p106 = scmp.ne.s32.totalorder %s94, %s95
      %p107 = scmp.eq.s32.totalorder %s22, 3
      %p108 = por %p106, %p107
      %p110 = scmp.ne.s32.totalorder %s95, %s109
      %p111 = scmp.eq.s32.totalorder %s22, 0
      %p112 = por %p110, %p111
      %s114 = sadd.s32 %s113, 1
      %p117 = scmp.eq.s32.totalorder %s16, 3
      %p118 = scmp.ne.s32.totalorder %s113, %s115
      %p119 = scmp.eq.s32.totalorder %s16, 0
      %p120 = por %p118, %p119
      %p121 = scmp.ne.s32.totalorder %s113, %s115
      %p122 = scmp.eq.s32.totalorder %s21, 3
      %p123 = por %p121, %p122
      %p124 = scmp.ne.s32.totalorder %s115, %s116
      %p125 = scmp.eq.s32.totalorder %s21, 0
      %p126 = por %p124, %p125
      %p127 = scmp.ne.s32.totalorder %s115, %s116
      %p128 = scmp.eq.s32.totalorder %s22, 3
      %p129 = por %p127, %p128
      %p131 = scmp.ne.s32.totalorder %s116, %s130
      %p132 = scmp.eq.s32.totalorder %s22, 0
      %p133 = por %p131, %p132
      %s134 = ssub.s32 %s16, %s23
      %p135 = scmp.eq.s32.totalorder %s134, 0
      %s137 = sadd.s32 %s136, 1
      %s138 = scalar_select %p135, %s136, %s137
      %p141 = pneg %p135
      %p142 = scmp.eq.s32.totalorder %s16, 3
      %p143 = por %p141, %p142
      %p144 = scmp.ne.s32.totalorder %s136, %s139
      %p145 = scmp.eq.s32.totalorder %s16, 0
      %p146 = por %p144, %p145
      %p147 = scmp.ne.s32.totalorder %s136, %s139
      %p148 = scmp.eq.s32.totalorder %s21, 3
      %p149 = por %p147, %p148
      %p150 = scmp.ne.s32.totalorder %s139, %s140
      %p151 = scmp.eq.s32.totalorder %s21, 0
      %p152 = por %p150, %p151
      %p153 = scmp.ne.s32.totalorder %s139, %s140
      %p154 = scmp.eq.s32.totalorder %s22, 3
      %p155 = por %p153, %p154
      %p157 = scmp.ne.s32.totalorder %s140, %s156
      %p158 = scmp.eq.s32.totalorder %s22, 0
      %p159 = por %p157, %p158
      %p160 = scmp.le.s32.totalorder 1, %s16
      %p161 = scmp.lt.s32.totalorder %s16, 5
      %p162 = pnand %p160, %p161
      %p163 = pneg %p162
      // Predicated region
      $region9: #{tpu_custom_call.1} parent=5 // pred_check
        _
      $region10: #{tpu_custom_call.1} parent=5 // pred_check_branch
        %165 = sbr.rel (%p162) target = $region12
      $region11: #{tpu_custom_call.1} parent=5 // pred_region
        %s166 = ssub.s32 %s16, 1
        // Predicated region
        $region13: #{tpu_custom_call.1} parent=11 // pred_check
          %p167 = pneg %p63
        $region14: #{tpu_custom_call.1} parent=11 // pred_check_branch
          %169 = sbr.rel (%p167) target = $region16
        $region15: #{tpu_custom_call.1} parent=11 // pred_region
          %171 = vsyncadd [#allocation4], 0
          %s172 = sshll.u32 %s1, 4
          %s173 = int_to_ptr.hbm [resolvable:$true] %s172
          %s174 = sshll.u32 [#allocation3], 4
          %s175 = int_to_ptr.vmem [resolvable:$true] %s174
          %180 = dma.hbm_to_vmem [thread:$0]  %s173, 128, %s175, [#allocation4], 64, 64, 4
        $region16: #{tpu_custom_call.1} parent=11 // pred_fallthru
          _
        // Predicated region
        $region17: #{tpu_custom_call.1} parent=11 // pred_check
          %p181 = pneg %p84
        $region18: #{tpu_custom_call.1} parent=11 // pred_check_branch
          %183 = sbr.rel (%p181) target = $region20
        $region19: #{tpu_custom_call.1} parent=11 // pred_region
          %185 = vsyncadd [#allocation7], 0
          %s186 = sshll.u32 %s2, 4
          %s187 = int_to_ptr.hbm [resolvable:$true] %s186
          %s188 = sshll.u32 [#allocation6], 4
          %s189 = int_to_ptr.vmem [resolvable:$true] %s188
          %194 = dma.hbm_to_vmem [thread:$0]  %s187, 128, %s189, [#allocation7], 64, 64, 4
        $region20: #{tpu_custom_call.1} parent=11 // pred_fallthru
          _
        // Predicated region
        $region21: #{tpu_custom_call.1} parent=11 // pred_check
          %p195 = pneg %p105
        $region22: #{tpu_custom_call.1} parent=11 // pred_check_branch
          %197 = sbr.rel (%p195) target = $region24
        $region23: #{tpu_custom_call.1} parent=11 // pred_region
          _
        $region24: #{tpu_custom_call.1} parent=11 // pred_fallthru
          _
        // Predicated region
        $region25: #{tpu_custom_call.1} parent=11 // pred_check
          %p198 = pneg %p126
        $region26: #{tpu_custom_call.1} parent=11 // pred_check_branch
          %200 = sbr.rel (%p198) target = $region28
        $region27: #{tpu_custom_call.1} parent=11 // pred_region
          _
        $region28: #{tpu_custom_call.1} parent=11 // pred_fallthru
          _
      $region12: #{tpu_custom_call.1} parent=5 // pred_fallthru
        _
      %p201 = scmp.lt.s32.totalorder %s16, 4
      // Predicated region
      $region29: #{tpu_custom_call.1} parent=5 // pred_check
        %p202 = pneg %p201
      $region30: #{tpu_custom_call.1} parent=5 // pred_check_branch
        %204 = sbr.rel (%p202) target = $region32
      $region31: #{tpu_custom_call.1} parent=5 // pred_region
        // Predicated region
        $region33: #{tpu_custom_call.1} parent=31 // pred_check
          %p205 = pneg %p36
        $region34: #{tpu_custom_call.1} parent=31 // pred_check_branch
          %207 = sbr.rel (%p205) target = $region36
        $region35: #{tpu_custom_call.1} parent=31 // pred_region
          %s208 = sand.u32 %s26, 1
          %s209 = sand.u32 %s26, 1
          %s210 = smul.addr %s209, 8
          %s211 = scalar_lea.vmem [#allocation2], %s210
          %s212 = smul.addr %s16, 4
          %s213 = scalar_lea.vmem %s0, %s212
          // Predicated region
          $region37: #{tpu_custom_call.1} parent=35 // pred_check
            _
          $region38: #{tpu_custom_call.1} parent=35 // pred_check_branch
            %215 = sbr.rel (0) target = $region40
          $region39: #{tpu_custom_call.1} parent=35 // pred_region
            // Predicated region
            $region41: #{tpu_custom_call.1} parent=39 // pred_check
              _
            $region42: #{tpu_custom_call.1} parent=39 // pred_check_branch
              %217 = sbr.rel target = $region44
            $region43: #{tpu_custom_call.1} parent=39 // pred_region
              // Predicated region
              $region56: #{tpu_custom_call.1} parent=43 // pred_check
                _
              $region57: #{tpu_custom_call.1} parent=43 // pred_check_branch
                %235 = sbr.rel (0) target = $region59
              $region58: #{tpu_custom_call.1} parent=43 // pred_region
                loop: start=0, step=1, limit=1
                $region60: #{tpu_custom_call.1} parent=58 // loop_pre_header
                  _
                $region61: #{tpu_custom_call.1} parent=58 // loop_header
                  %s237 = sphi 0, %s241
                  %p238 = scmp.ge.s32.totalorder %s237, 1
                  %s242 = sphi %s213, %s213
                  %s243 = sphi %s211, %s211
                $region62: #{tpu_custom_call.1} parent=58 // loop_header_branch
                  %240 = sbr.rel (%p238) target = $region66
                $region63: #{tpu_custom_call.1} parent=58 // loop_body
                  _
                $region64: #{tpu_custom_call.1} parent=58 // loop_footer
                  %s241 = sadd.s32 1, %s237
                $region65: #{tpu_custom_call.1} parent=58 // loop_footer_branch
                  %236 = sbr.rel target = $region61
                $region66: #{tpu_custom_call.1} parent=58 // loop_exit
                  _
                %s245 = ssub.s32 16, 1
                loop: start=0, step=1, limit=1
                $region67: #{tpu_custom_call.1} parent=58 // loop_pre_header
                  _
                $region68: #{tpu_custom_call.1} parent=58 // loop_header
                  %s247 = sphi 0, %s251
                  %p248 = scmp.ge.s32.totalorder %s247, 1
                  %s252 = sphi %s213, %s213
                  %s253 = sphi %s211, %s211
                $region69: #{tpu_custom_call.1} parent=58 // loop_header_branch
                  %250 = sbr.rel (%p248) target = $region73
                $region70: #{tpu_custom_call.1} parent=58 // loop_body
                  %v254 = vld [vmem:[%s252] sm:%s245]
                  %255 = vst [vmem:[%s253] sm:%s245] %v254
                  %v256 = vld [vmem:[%s252 + $0x10] sm:%s245]
                  %257 = vst [vmem:[%s253 + $0x4] sm:%s245] %v256
                $region71: #{tpu_custom_call.1} parent=58 // loop_footer
                  %s251 = sadd.s32 1, %s247
                $region72: #{tpu_custom_call.1} parent=58 // loop_footer_branch
                  %246 = sbr.rel target = $region68
                $region73: #{tpu_custom_call.1} parent=58 // loop_exit
                  _
              $region59: #{tpu_custom_call.1} parent=43 // pred_fallthru
                _
            $region44: #{tpu_custom_call.1} parent=39 // pred_fallthru
              _
            // Predicated region
            $region45: #{tpu_custom_call.1} parent=39 // pred_check
              _
            $region46: #{tpu_custom_call.1} parent=39 // pred_check_branch
              %219 = sbr.rel (0) target = $region48
            $region47: #{tpu_custom_call.1} parent=39 // pred_region
              %s221 = ssub.s32 16, 1
              loop: start=0, step=1, limit=1
              $region49: #{tpu_custom_call.1} parent=47 // loop_pre_header
                _
              $region50: #{tpu_custom_call.1} parent=47 // loop_header
                %s223 = sphi 0, %s227
                %p224 = scmp.ge.s32.totalorder %s223, 1
                %s228 = sphi %s213, %s213
                %s229 = sphi %s211, %s211
              $region51: #{tpu_custom_call.1} parent=47 // loop_header_branch
                %226 = sbr.rel (%p224) target = $region55
              $region52: #{tpu_custom_call.1} parent=47 // loop_body
                %v230 = vld [vmem:[%s228] sm:%s221]
                %231 = vst [vmem:[%s229] sm:%s221] %v230
                %v232 = vld [vmem:[%s228 + $0x10] sm:%s221]
                %233 = vst [vmem:[%s229 + $0x4] sm:%s221] %v232
              $region53: #{tpu_custom_call.1} parent=47 // loop_footer
                %s227 = sadd.s32 1, %s223
              $region54: #{tpu_custom_call.1} parent=47 // loop_footer_branch
                %222 = sbr.rel target = $region50
              $region55: #{tpu_custom_call.1} parent=47 // loop_exit
                _
            $region48: #{tpu_custom_call.1} parent=39 // pred_fallthru
              _
          $region40: #{tpu_custom_call.1} parent=35 // pred_fallthru
            _
          %258 = vnop
        $region36: #{tpu_custom_call.1} parent=31 // pred_fallthru
          _
      $region32: #{tpu_custom_call.1} parent=5 // pred_fallthru
        _
      %p259 = scmp.le.s32.totalorder 1, %s16
      %p260 = scmp.lt.s32.totalorder %s16, 5
      %p261 = pnand %p259, %p260
      %p262 = pneg %p261
      // Predicated region
      $region74: #{tpu_custom_call.1} parent=5 // pred_check
        _
      $region75: #{tpu_custom_call.1} parent=5 // pred_check_branch
        %264 = sbr.rel (%p261) target = $region77
      $region76: #{tpu_custom_call.1} parent=5 // pred_region
        %s265 = ssub.s32 %s16, 1
        %s266 = sand.u32 %s29, 1
        %s267 = sand.u32 %s29, 1
        %s268 = smul.addr %s267, 8
        %s269 = scalar_lea.vmem [#allocation2], %s268
        // Predicated region
        $region78: #{tpu_custom_call.1} parent=76 // pred_check
          %p270 = pneg %p42
        $region79: #{tpu_custom_call.1} parent=76 // pred_check_branch
          %272 = sbr.rel (%p270) target = $region81
        $region80: #{tpu_custom_call.1} parent=76 // pred_region
          _
        $region81: #{tpu_custom_call.1} parent=76 // pred_fallthru
          _
        // Predicated region
        $region82: #{tpu_custom_call.1} parent=76 // pred_check
          %p273 = pneg %p63
        $region83: #{tpu_custom_call.1} parent=76 // pred_check_branch
          %275 = sbr.rel (%p273) target = $region85
        $region84: #{tpu_custom_call.1} parent=76 // pred_region
          %277 = dma.done [#allocation4], 128
        $region85: #{tpu_custom_call.1} parent=76 // pred_fallthru
          _
        // Predicated region
        $region86: #{tpu_custom_call.1} parent=76 // pred_check
          %p278 = pneg %p84
        $region87: #{tpu_custom_call.1} parent=76 // pred_check_branch
          %280 = sbr.rel (%p278) target = $region89
        $region88: #{tpu_custom_call.1} parent=76 // pred_region
          %282 = dma.done [#allocation7], 128
        $region89: #{tpu_custom_call.1} parent=76 // pred_fallthru
          _
        %s283 = sand.u32 %s29, 1
        %s284 = sand.u32 %s29, 1
        %s285 = smul.addr %s284, 8
        %s286 = scalar_lea.vmem [#allocation2], %s285
        %p287 = pneg %p42
        %p288 = pneg %p39
        %p289 = pneg %p63
        %p290 = pneg %p60
        %p291 = pneg %p84
        %p292 = pneg %p81
        %p293 = pneg %p105
        %p294 = pneg %p102
        %p295 = pneg %p126
        %p296 = pneg %p123
        %p297 = pneg %p152
        %p298 = pneg %p149
        %s299 = sand.u32 %s139, 1
        %s300 = scalar_lea.sflag [#allocation5], %s299
        %s301 = sand.u32 %s139, 1
        %s302 = smul.addr %s301, 8
        %s303 = scalar_lea.vmem [#allocation8], %s302
        %v307 = vld [vmem:[%s269] sm:$0xf]
        %v308 = vld [vmem:[%s269 + $0x4] sm:$0xf]
        %v309 = vunpack.c.l.bf16 %v307
        %v310 = vunpack.c.l.bf16 %v308
        %v311 = vlaneseq
        %v312 = vand.u32 %v311, 127
        %vm313 = vcmp.lt.s32.totalorder %v312, 0
        %v314 = vsub.s32 0, %v312
        %v315 = vsel %vm313, %v314, %v312
        %v316 = vshrl.u32 %v315, 7
        %v317 = vand.u32 %v315, 127
        %v318 = vsub.s32 0, %v317
        %v319 = vsel %vm313, %v318, %v317
        %vm320 = vcmp.ne.s32.totalorder %v319, 0
        %vm321 = vcmp.lt.s32.totalorder %v319, 0
        %vm322 = vmand %vm321, %vm320
        %v323 = vadd.s32 %v319, 128
        %v324 = vsel %vm322, %v323, %v319
        %vm325 = vcmp.ge.s32.totalorder %v324, 6
        %vm326 = vcmp.ge.s32.totalorder %v324, 4
        %vm327 = vcmp.ge.s32.totalorder %v324, 2
        %v330 = vunpack.c.l.b16 %v307
        %v331 = vunpack.c.l.b16 %v308
        %v332 = vpack.c.b16 %v331, %v330
        %333 = vrot.lane.b32.xlu0 %v332, 6
        %v334 = vpop.permute.xlu0 %333
        %vm337 = vmpackc.low %vm325, %vm325
        %v338 = vsel %vm337, 65537, 0
        %v339 = vperm.slane %v338, 0
        %v340 = vunpack.c.l.b16 %v339
        %v341 = vunpack.c.h.b16 %v339
        %v342 = vunpack.c.l.b16 0
        %v343 = vunpack.c.h.b16 0
        %vm344 = vcmp.ne.s32.totalorder %v340, %v342
        %vm345 = vcmp.ne.s32.totalorder %v341, %v343
        %vm346 = vmpackc.low %vm345, %vm344
        %v347 = vsel %vm346, %v334, 0
        %348 = vrot.lane.b32.xlu0 %v332, 4
        %v349 = vpop.permute.xlu0 %348
        %vm352 = vmpackc.low %vm326, %vm326
        %v353 = vsel %vm352, 65537, 0
        %v354 = vperm.slane %v353, 0
        %v355 = vunpack.c.l.b16 %v354
        %v356 = vunpack.c.h.b16 %v354
        %v357 = vunpack.c.l.b16 0
        %v358 = vunpack.c.h.b16 0
        %vm359 = vcmp.ne.s32.totalorder %v355, %v357
        %vm360 = vcmp.ne.s32.totalorder %v356, %v358
        %vm361 = vmpackc.low %vm360, %vm359
        %v362 = vsel %vm361, %v349, 0
        %363 = vrot.lane.b32.xlu0 %v332, 2
        %v364 = vpop.permute.xlu0 %363
        %vm367 = vmpackc.low %vm327, %vm327
        %v368 = vsel %vm367, 65537, 0
        %v369 = vperm.slane %v368, 0
        %v370 = vunpack.c.l.b16 %v369
        %v371 = vunpack.c.h.b16 %v369
        %v372 = vunpack.c.l.b16 0
        %v373 = vunpack.c.h.b16 0
        %vm374 = vcmp.ne.s32.totalorder %v370, %v372
        %vm375 = vcmp.ne.s32.totalorder %v371, %v373
        %vm376 = vmpackc.low %vm375, %vm374
        %v377 = vsel %vm376, %v364, 0
        %v379 = vld [vmem:[#allocation3] sm:$0xf]
        %v380 = vld [vmem:[#allocation3 + $0x4] sm:$0xf]
        %v381 = vld [vmem:[%s3] sm:$0xff]
        %v382 = vld [vmem:[%s3 + $0x8] sm:$0xff]
        %384 = vset.pattern.permute.xlu0 0
        %385 = vperm.xlu0 %384, %v381
        %v386 = vpop.permute.xlu0 %385
        %389 = vset.pattern.permute.xlu0 0
        %390 = vperm.xlu0 %389, %v382
        %v391 = vpop.permute.xlu0 %390
        %v395 = vunpack.c.l.b16 %v379
        %v396 = vunpack.c.l.b16 %v380
        %v397 = vpack.c.b16 %v396, %v395
        %vm398 = vcmask 523264
        %v400 = vsel %vm398, %v397, 0
        %402 = vmatpush.bf16.msra.mxu0 0
        %403 = vmatpush.bf16.msra.mxu0 0
        %404 = vmatpush.bf16.msra.mxu0 0
        %405 = vmatpush.bf16.msra.mxu0 0
        %406 = vmatpush.bf16.msra.mxu0 %v332
        %407 = vmatpush.bf16.msra.mxu0 %v377
        %408 = vmatpush.bf16.msra.mxu0 %v362
        %409 = vmatpush.bf16.msra.mxu0 %v347
        %410 = vmatmul.bf16.gmra.mxu0 %v400
        %v411 = vpop.f32.mrf.mxu0
        %v412 = vadd.f32 %v386, %v411
        %v413 = vpop.f32.mrf.mxu0
        %v414 = vadd.f32 %v391, %v413
        %415 = vdwg.mxu0
        %vm416 = vcmp.gt.f32.partialorder %v412, 0.0
        %vm417 = vcmp.gt.f32.partialorder %v414, 0.0
        %v418 = vmin.f32 %v412, 0.0
        %v419 = vmin.f32 %v414, 0.0
        %v420 = vmul.f32 %v418, 1.442695
        %v421 = vpow.pop %v420
        %v422 = vmul.f32 %v419, 1.442695
        %v423 = vpow.pop %v422
        %v424 = vsub.f32 %v421, 1.0
        %v425 = vsub.f32 %v423, 1.0
        %v426 = vsel %vm416, %v412, %v424
        %v427 = vsel %vm417, %v414, %v425
        %v428 = vpack.c.bf16 %v426, %v426
        %v429 = vpack.c.bf16 %v427, %v427
        %v432 = vunpack.c.l.b16 %v428
        %v433 = vunpack.c.l.b16 %v429
        %v434 = vpack.c.b16 %v433, %v432
        %435 = vrot.lane.b32.xlu0 %v434, 6
        %v436 = vpop.permute.xlu0 %435
        %v439 = vsel %vm346, %v436, 0
        %440 = vrot.lane.b32.xlu0 %v434, 4
        %v441 = vpop.permute.xlu0 %440
        %v444 = vsel %vm361, %v441, 0
        %445 = vrot.lane.b32.xlu0 %v434, 2
        %v446 = vpop.permute.xlu0 %445
        %v449 = vsel %vm376, %v446, 0
        %v451 = vld [vmem:[#allocation6] sm:$0xf]
        %v452 = vld [vmem:[#allocation6 + $0x4] sm:$0xf]
        %v453 = vld [vmem:[%s4] sm:$0xff]
        %v454 = vld [vmem:[%s4 + $0x8] sm:$0xff]
        %456 = vset.pattern.permute.xlu0 0
        %457 = vperm.xlu0 %456, %v453
        %v458 = vpop.permute.xlu0 %457
        %461 = vset.pattern.permute.xlu0 0
        %462 = vperm.xlu0 %461, %v454
        %v463 = vpop.permute.xlu0 %462
        %v467 = vunpack.c.l.b16 %v451
        %v468 = vunpack.c.l.b16 %v452
        %v469 = vpack.c.b16 %v468, %v467
        %v471 = vsel %vm398, %v469, 0
        %473 = vmatpush.bf16.msra.mxu0 0
        %474 = vmatpush.bf16.msra.mxu0 0
        %475 = vmatpush.bf16.msra.mxu0 0
        %476 = vmatpush.bf16.msra.mxu0 0
        %477 = vmatpush.bf16.msra.mxu0 %v434
        %478 = vmatpush.bf16.msra.mxu0 %v449
        %479 = vmatpush.bf16.msra.mxu0 %v444
        %480 = vmatpush.bf16.msra.mxu0 %v439
        %481 = vmatmul.bf16.gmra.mxu0 %v471
        %v482 = vpop.f32.mrf.mxu0
        %v483 = vadd.f32 %v458, %v482
        %v484 = vpop.f32.mrf.mxu0
        %v485 = vadd.f32 %v463, %v484
        %486 = vdwg.mxu0
        %vm487 = vcmp.gt.f32.partialorder %v483, 0.0
        %vm488 = vcmp.gt.f32.partialorder %v485, 0.0
        %v489 = vmin.f32 %v483, 0.0
        %v490 = vmin.f32 %v485, 0.0
        %v491 = vmul.f32 %v489, 1.442695
        %v492 = vpow.pop %v491
        %v493 = vmul.f32 %v490, 1.442695
        %v494 = vpow.pop %v493
        %v495 = vsub.f32 %v492, 1.0
        %v496 = vsub.f32 %v494, 1.0
        %v497 = vsel %vm487, %v483, %v495
        %v498 = vsel %vm488, %v485, %v496
        %v499 = vadd.f32 %v309, %v497
        %v500 = vadd.f32 %v310, %v498
        %vm501 = vcmp.gt.f32.partialorder %v499, 0.0
        %vm502 = vcmp.gt.f32.partialorder %v500, 0.0
        %v503 = vmin.f32 %v499, 0.0
        %v504 = vmin.f32 %v500, 0.0
        %v505 = vmul.f32 %v503, 1.442695
        %v506 = vpow.pop %v505
        %v507 = vmul.f32 %v504, 1.442695
        %v508 = vpow.pop %v507
        %v509 = vsub.f32 %v506, 1.0
        %v510 = vsub.f32 %v508, 1.0
        %v511 = vsel %vm501, %v499, %v509
        %v512 = vsel %vm502, %v500, %v510
        %v513 = vpack.c.bf16 %v511, %v511
        %v514 = vpack.c.bf16 %v512, %v512
        %515 = vst [vmem:[%s303] sm:$0xf] %v513
        %516 = vst [vmem:[%s303 + $0x4] sm:$0xf] %v514
        %s517 = sand.u32 %s139, 1
        %s518 = scalar_lea.sflag [#allocation5], %s517
        %s519 = sand.u32 %s139, 1
        %s520 = smul.addr %s519, 8
        %s521 = scalar_lea.vmem [#allocation8], %s520
        // Predicated region
        $region90: #{tpu_custom_call.1} parent=76 // pred_check
          %p522 = pneg %p149
        $region91: #{tpu_custom_call.1} parent=76 // pred_check_branch
          %524 = sbr.rel (%p522) target = $region93
        $region92: #{tpu_custom_call.1} parent=76 // pred_region
          %526 = vsyncadd %s518, 0
          %s527 = smul.addr %s21, 4
          %s528 = scalar_lea.hbm %s5, %s527
          %s529 = sshll.u32 %s521, 4
          %s530 = int_to_ptr.vmem [resolvable:$true] %s529
          %s531 = sshll.u32 %s528, 4
          %s532 = int_to_ptr.hbm [resolvable:$true] %s531
          %537 = dma.vmem_to_hbm [thread:$0]  %s530, 128, %s532, %s518, 64, 256, 4
        $region93: #{tpu_custom_call.1} parent=76 // pred_fallthru
          _
      $region77: #{tpu_custom_call.1} parent=5 // pred_fallthru
        _
      %p538 = scmp.le.s32.totalorder 2, %s16
      // Predicated region
      $region94: #{tpu_custom_call.1} parent=5 // pred_check
        %p539 = pneg %p538
      $region95: #{tpu_custom_call.1} parent=5 // pred_check_branch
        %541 = sbr.rel (%p539) target = $region97
      $region96: #{tpu_custom_call.1} parent=5 // pred_region
        %s542 = ssub.s32 %s16, 2
        // Predicated region
        $region98: #{tpu_custom_call.1} parent=96 // pred_check
          %p543 = pneg %p155
        $region99: #{tpu_custom_call.1} parent=96 // pred_check_branch
          %545 = sbr.rel (%p543) target = $region101
        $region100: #{tpu_custom_call.1} parent=96 // pred_region
          %s546 = sand.u32 %s140, 1
          %s547 = scalar_lea.sflag [#allocation5], %s546
          %s548 = sand.u32 %s140, 1
          %s549 = smul.addr %s548, 8
          %s550 = scalar_lea.vmem [#allocation8], %s549
          %552 = dma.done %s547, 128
        $region101: #{tpu_custom_call.1} parent=96 // pred_fallthru
          _
      $region97: #{tpu_custom_call.1} parent=5 // pred_fallthru
        _
    $region6: #{tpu_custom_call.1} parent=1 // loop_footer
      %s20 = sadd.s32 1, %s16
    $region7: #{tpu_custom_call.1} parent=1 // loop_footer_branch
      %15 = sbr.rel target = $region3
    $region8: #{tpu_custom_call.1} parent=1 // loop_exit
      _
    %553 = vsyncpa [#allocation4], 1
    %s554 = scalar_lea.sflag [#allocation4], 1
    %555 = vsyncpa %s554, 1
    %556 = vsyncpa [#allocation7], 1
    %557 = vsyncpa [#allocation5], 1
    %s558 = scalar_lea.sflag [#allocation5], 1
    %559 = vsyncpa %s558, 1

</llo_original>
